<compile_context>
chip_gen: v7x
topology: tpu7x:2x2x1
jax: 0.10.0
libtpu: 0.0.40
codegen_flags: <defaults>
</compile_context>

<pallas_src>
import functools
import math

import jax
import jax.numpy as jnp
from jax.experimental import pallas as pl
from jax.experimental.pallas import tpu as pltpu


def _round_up(x: int, m: int) -> int:
    return ((x + m - 1) // m) * m


def _vmem_limit_bytes() -> int:
    cap = 0
    try:
        info = pltpu.get_tpu_info()
        cap = int(getattr(info, "vmem_capacity_bytes", 0) or 0)
    except Exception:
        cap = 0
    if cap <= 0:
        cap = 64 * 1024 * 1024          # conservative fallback (v7x-sized)
    # ~15% headroom for internal scratch / semaphores, cap near v6e sweet spot.
    return min(int(cap * 0.85), 110 * 1024 * 1024)


# ---------------------------------------------------------------------------
# Pass 1: K-tiled aggregation + (optional) linear + L2-normalize + ReLU,
#         plus packed per-node BN partial sums.  Grid = (B, nt, kt).
# ---------------------------------------------------------------------------
def _gs_fwd_kernel(*refs, add_self: bool, mean_norm: bool, reassociated: bool):
    it = iter(refs)
    adj_ref = next(it)                                    # (TN, TK)   bf16/f32
    feat_ref = next(it)                                   # (TK, F)    bf16/f32
    feat_self_ref = next(it) if add_self else None        # (TN, F)
    wt_ref = None if reassociated else next(it)           # (Fi, Fo)   f32
    b_ref = next(it)                                      # (1, Fo)    f32
    h_ref = next(it)                                      # (TN, Fo)   f32 out
    stat_ref = next(it)                                   # (TN, 2)    f32 out
    acc_ref = next(it)                                    # (TN, F)    f32 scratch
    rowsum_ref = next(it)                                 # (TN, 1)    f32 scratch

    ki = pl.program_id(2)

    @pl.when(ki == 0)
    def _init():
        acc_ref[...] = jnp.zeros_like(acc_ref)
        if mean_norm:
            rowsum_ref[...] = jnp.zeros_like(rowsum_ref)

    adj = adj_ref[...]                                    # stays bf16 for the MXU
    acc_ref[...] += jnp.dot(adj, feat_ref[...],
                            preferred_element_type=jnp.float32)
    if mean_norm:
        # Cheap row-degree accumulation (gated: only traced when mean=True).
        rowsum_ref[...] += jnp.sum(adj.astype(jnp.float32), axis=-1,
                                   keepdims=True)

    @pl.when(ki == pl.num_programs(2) - 1)
    def _finish():
        h = acc_ref[...]
        if add_self:
            # (adj + I) @ feat  ==  adj @ feat + feat[row tile]
            h = h + feat_self_ref[...].astype(jnp.float32)
        if mean_norm:
            # Row scaling commutes with the matmul; +1 accounts for the self
            # loop.  Zero-degree rows divide by 0 (NaN), matching PyTorch.
            h = h / (rowsum_ref[...] + (1.0 if add_self else 0.0))
        if not reassociated:
            h = jnp.dot(h, wt_ref[...], preferred_element_type=jnp.float32)
        h = h + b_ref[...]

        # F.normalize(dim=-1, p=2, eps=1e-12) == h * rsqrt(max(sum(h^2), eps^2))
        ssq = jnp.sum(h * h, axis=-1, keepdims=True)
        h = h * jax.lax.rsqrt(jnp.maximum(ssq, 1e-24))
        h = jnp.maximum(h, 0.0)                           # ReLU

        h_ref[...] = h
        # Packed per-node BN partials (padded feature lanes are exactly 0).
        stat_ref[:, 0:1] = jnp.sum(h, axis=-1, keepdims=True)
        stat_ref[:, 1:2] = jnp.sum(h * h, axis=-1, keepdims=True)


# ---------------------------------------------------------------------------
# Pass 2: apply BatchNorm with precomputed per-node (mu, inv_std), in place.
# ---------------------------------------------------------------------------
def _bn_apply_kernel(h_ref, st_ref, out_ref):
    out_ref[...] = (h_ref[...] - st_ref[:, 0:1]) * st_ref[:, 1:2]


def batched_graphsage(x, adj, w, b, *,
                      add_self: bool = False,
                      mean: bool = False,
                      use_bn: bool = True,
                      row_tile: int = 512,
                      k_tile: int = 2048,
                      compute_dtype=jnp.bfloat16):
    """x: (B,N,Fi), adj: (B,N,N), w: (Fo,Fi), b: (Fo,) -> (B,N,Fo) f32."""
    B, N, Fi = x.shape
    Fo = w.shape[0]
    x = x.astype(jnp.float32)
    w = w.astype(jnp.float32)
    b = b.astype(jnp.float32)

    # ---- tiling / padding plan -------------------------------------------
    fi_pad = _round_up(Fi, 128)
    fo_pad = _round_up(Fo, 128)
    tn = row_tile if N > row_tile else _round_up(N, 16)   # 16: bf16 sublane pack
    k_tile = _round_up(k_tile, tn)
    if _round_up(N, tn) <= k_tile:
        n_pad = _round_up(N, tn)
        tkn = n_pad                                        # single K step
    else:
        n_pad = _round_up(N, k_tile)
        tkn = k_tile
    nt = n_pad // tn
    kt = n_pad // tkn

    # Reassociate (adj@x)@W^T -> adj@(xW^T) when it shrinks the dominant matmul.
    reassociated = fo_pad <= fi_pad
    fcols = fo_pad if reassociated else fi_pad
    f_real = Fo if reassociated else Fi

    # ---- wrapper-side operand prep (cast BEFORE pad, pad only if needed) --
    adj_c = adj.astype(compute_dtype)
    if n_pad != N:
        adj_c = jnp.pad(adj_c, ((0, 0), (0, n_pad - N), (0, n_pad - N)))

    if reassociated:
        feat = jnp.einsum("bnf,of->bno", x, w,
                          precision=jax.lax.Precision.HIGHEST)
    else:
        feat = x
    feat = feat.astype(compute_dtype)
    if n_pad != N or fcols != f_real:
        feat = jnp.pad(feat, ((0, 0), (0, n_pad - N), (0, fcols - f_real)))

    bias = b.reshape(1, Fo)
    if fo_pad != Fo:
        bias = jnp.pad(bias, ((0, 0), (0, fo_pad - Fo)))

    operands = [adj_c, feat]
    in_specs = [
        pl.BlockSpec((None, tn, tkn), lambda bi, ri, ki: (bi, ri, ki)),   # adj tile
        pl.BlockSpec((None, tkn, fcols), lambda bi, ri, ki: (bi, ki, 0)),  # features
    ]
    if add_self:
        operands.append(feat)                                              # row-tile view
        in_specs.append(pl.BlockSpec((None, tn, fcols),
                                     lambda bi, ri, ki: (bi, ri, 0)))
    if not reassociated:
        wt = w.T                                                           # (Fi, Fo)
        if fi_pad != Fi or fo_pad != Fo:
            wt = jnp.pad(wt, ((0, fi_pad - Fi), (0, fo_pad - Fo)))
        operands.append(wt)
        in_specs.append(pl.BlockSpec((fi_pad, fo_pad),
                                     lambda bi, ri, ki: (0, 0)))
    operands.append(bias)
    in_specs.append(pl.BlockSpec((1, fo_pad), lambda bi, ri, ki: (0, 0)))

    vmem_limit = _vmem_limit_bytes()
    cparams = pltpu.CompilerParams(
        dimension_semantics=("parallel", "parallel", "arbitrary"),
        vmem_limit_bytes=vmem_limit)

    itemsize = jnp.dtype(compute_dtype).itemsize
    flops = 2 * B * n_pad * n_pad * fcols
    if not reassociated:
        flops += 2 * B * n_pad * fi_pad * fo_pad
    cost = pl.CostEstimate(
        flops=int(flops),
        transcendentals=int(B * n_pad),
        bytes_accessed=int(B * n_pad * n_pad * itemsize
                           + B * n_pad * fcols * itemsize
                           + B * n_pad * (fo_pad + 2) * 4),
    )

    kernel = functools.partial(_gs_fwd_kernel, add_self=add_self,
                               mean_norm=mean, reassociated=reassociated)

    h, stats = pl.pallas_call(
        kernel,
        grid=(B, nt, kt),
        in_specs=in_specs,
        out_specs=(
            pl.BlockSpec((None, tn, fo_pad), lambda bi, ri, ki: (bi, ri, 0)),
            pl.BlockSpec((None, tn, 2), lambda bi, ri, ki: (bi, ri, 0)),
        ),
        out_shape=(
            jax.ShapeDtypeStruct((B, n_pad, fo_pad), jnp.float32),
            jax.ShapeDtypeStruct((B, n_pad, 2), jnp.float32),
        ),
        scratch_shapes=[pltpu.VMEM((tn, fcols), jnp.float32),   # f32 accumulator
                        pltpu.VMEM((tn, 1), jnp.float32)],      # rowsum accumulator
        compiler_params=cparams,
        cost_estimate=cost,
    )(*operands)

    if not use_bn:
        return h[:, :N, :Fo]

    # ---- tiny O(B*N) epilogue: fold partials into per-node batch stats ----
    cnt = float(B * Fo)                      # real feature width (pads are 0)
    mu = jnp.sum(stats[..., 0:1], axis=0) / cnt          # (n_pad, 1)
    ex2 = jnp.sum(stats[..., 1:2], axis=0) / cnt
    var = jnp.maximum(ex2 - mu * mu, 0.0)                # biased variance
    inv_std = jax.lax.rsqrt(var + 1e-5)
    bn_st = jnp.concatenate([mu, inv_std], axis=-1)      # (n_pad, 2)

    # ---- pass 2: large lane-dense blocks, normalized in place -------------
    m = 1
    for cand in range(nt, 0, -1):
        if nt % cand == 0 and cand * tn * fo_pad * 4 <= 4 * 1024 * 1024:
            m = cand
            break
    tbn = m * tn

    out = pl.pallas_call(
        _bn_apply_kernel,
        grid=(B, n_pad // tbn),
        in_specs=[pl.BlockSpec((None, tbn, fo_pad), lambda bi, ri: (bi, ri, 0)),
                  pl.BlockSpec((tbn, 2), lambda bi, ri: (ri, 0))],
        out_specs=pl.BlockSpec((None, tbn, fo_pad), lambda bi, ri: (bi, ri, 0)),
        out_shape=jax.ShapeDtypeStruct((B, n_pad, fo_pad), jnp.float32),
        input_output_aliases={0: 0},
        compiler_params=pltpu.CompilerParams(
            dimension_semantics=("parallel", "parallel"),
            vmem_limit_bytes=vmem_limit),
    )(h, bn_st)

    return out[:, :N, :Fo]


# ---------------------------------------------------------------------------
# Pure-JAX reference matching the PyTorch module (training-mode BN), computed
# at HIGHEST matmul precision.
# ---------------------------------------------------------------------------
def reference(x, adj, w, b, *, add_self=False, mean=False, use_bn=True):
    N = adj.shape[1]
    if add_self:
        adj = adj + jnp.eye(N, dtype=adj.dtype)[None]
    if mean:
        adj = adj / adj.sum(-1, keepdims=True)
    hp = jax.lax.Precision.HIGHEST
    h = jnp.einsum("bnm,bmf->bnf", adj, x, precision=hp)
    h = jnp.einsum("bnf,of->bno", h, w, precision=hp) + b[None, None, :]
    nrm = jnp.sqrt(jnp.sum(h * h, axis=2, keepdims=True))
    h = h / jnp.maximum(nrm, 1e-12)
    h = jax.nn.relu(h)
    if use_bn:
        mu = h.mean(axis=(0, 2), keepdims=True)
        var = ((h - mu) ** 2).mean(axis=(0, 2), keepdims=True)
        h = (h - mu) / jnp.sqrt(var + 1e-5)
    return h


if __name__ == "__main__":
    key = jax.random.PRNGKey(0)
    B, N, Fi, Fo = 2, 16, 32, 32
    kx, ka, kw, kb = jax.random.split(key, 4)

    x = jax.random.normal(kx, (B, N, Fi), dtype=jnp.float32)
    adj = (jax.random.uniform(ka, (B, N, N)) > 0.6).astype(jnp.float32)  # 0/1: bf16-exact

    # Xavier-uniform with gain = calculate_gain('relu') = sqrt(2); Linear bias init.
    gain = math.sqrt(2.0)
    bw = gain * math.sqrt(6.0 / (Fi + Fo))
    w = jax.random.uniform(kw, (Fo, Fi), minval=-bw, maxval=bw, dtype=jnp.float32)
    bb = 1.0 / math.sqrt(Fi)
    b = jax.random.uniform(kb, (Fo,), minval=-bb, maxval=bb, dtype=jnp.float32)

    # 1) Default config (use_bn=True), bf16 aggregation (fast path).
    #    bf16 rounding of the feature operand (~0.4% rel) amplified ~10x by the
    #    BN inverse-std bounds the error well under 4e-2.
    fwd = jax.jit(functools.partial(batched_graphsage, use_bn=True))
    out = jax.block_until_ready(fwd(x, adj, w, b))
    ref = reference(x, adj, w, b, use_bn=True)
    assert out.shape == (B, N, Fo)
    err = float(jnp.max(jnp.abs(out - ref)))
    assert err < 4e-2, f"bf16 path mismatch (max err {err})"

    # 2) Same config with f32 compute dtype: tight structural/numerical check.
    fwd32 = jax.jit(functools.partial(batched_graphsage, use_bn=True,
                                      compute_dtype=jnp.float32))
    out32 = jax.block_until_ready(fwd32(x, adj, w, b))
    err32 = float(jnp.max(jnp.abs(out32 - ref)))
    assert err32 < 2e-3, f"f32 path mismatch (max err {err32})"

    # 3) add_self + mean, no BN, N not a tile multiple (padding path).
    N2 = 20
    x2 = jax.random.normal(jax.random.fold_in(kx, 1), (B, N2, Fi), dtype=jnp.float32)
    adj2 = (jax.random.uniform(jax.random.fold_in(ka, 1), (B, N2, N2)) > 0.5
            ).astype(jnp.float32)
    fwd2 = jax.jit(functools.partial(batched_graphsage, add_self=True,
                                     mean=True, use_bn=False))
    out2 = jax.block_until_ready(fwd2(x2, adj2, w, b))
    ref2 = reference(x2, adj2, w, b, add_self=True, mean=True, use_bn=False)
    assert out2.shape == (B, N2, Fo)
    err2 = float(jnp.max(jnp.abs(out2 - ref2)))
    assert err2 < 4e-2, f"add_self/mean path mismatch (max err {err2})"

    # 4) Fo > Fi exercises the non-reassociated (two-matmul) kernel path.
    N3, Fo3 = 24, 160
    kx3, ka3, kw3, kb3 = jax.random.split(jax.random.fold_in(key, 2), 4)
    x3 = jax.random.normal(kx3, (B, N3, Fi), dtype=jnp.float32)
    adj3 = (jax.random.uniform(ka3, (B, N3, N3)) > 0.6).astype(jnp.float32)
    bw3 = gain * math.sqrt(6.0 / (Fi + Fo3))
    w3 = jax.random.uniform(kw3, (Fo3, Fi), minval=-bw3, maxval=bw3,
                            dtype=jnp.float32)
    b3 = jax.random.uniform(kb3, (Fo3,), minval=-bb, maxval=bb, dtype=jnp.float32)
    out3 = jax.block_until_ready(fwd(x3, adj3, w3, b3))
    ref3 = reference(x3, adj3, w3, b3, use_bn=True)
    assert out3.shape == (B, N3, Fo3)
    err3 = float(jnp.max(jnp.abs(out3 - ref3)))
    assert err3 < 4e-2, f"non-reassociated path mismatch (max err {err3})"

    print("KERNEL_OK")
</pallas_src>

<mosaic_0001>
module attributes {stable_mosaic.version = 11 : i64} {
  func.func @_bn_apply_kernel(%arg0: i32, %arg1: i32, %arg2: memref<1x16x128xf32, #tpu.memory_space<vmem>>, %arg3: memref<16x2xf32, #tpu.memory_space<vmem>>, %arg4: memref<1x16x128xf32, #tpu.memory_space<vmem>>) attributes {dimension_semantics = [#tpu.dimension_semantics<parallel>, #tpu.dimension_semantics<parallel>], iteration_bounds = array<i64: 2, 1>, scalar_prefetch = 0 : i64, scratch_operands = 0 : i64, tpu.core_type = #tpu.core_type<tc>, window_params = [{transform_indices = @transform_0, window_bounds = array<i64: 1, 16, 128>}, {transform_indices = @transform_1, window_bounds = array<i64: 16, 2>}, {transform_indices = @transform_2, window_bounds = array<i64: 1, 16, 128>}]} {
    %c0 = arith.constant 0 : index
    %c0_0 = arith.constant 0 : index
    %c0_1 = arith.constant 0 : index
    %0 = vector.load %arg2[%c0, %c0_0, %c0_1] : memref<1x16x128xf32, #tpu.memory_space<vmem>>, vector<1x16x128xf32>
    %1 = vector.shape_cast %0 : vector<1x16x128xf32> to vector<16x128xf32>
    %c0_2 = arith.constant 0 : index
    %c0_3 = arith.constant 0 : index
    %2 = vector.load %arg3[%c0_2, %c0_3] : memref<16x2xf32, #tpu.memory_space<vmem>>, vector<16x1xf32>
    %3 = vector.broadcast %2 : vector<16x1xf32> to vector<16x128xf32>
    %4 = arith.subf %1, %3 : vector<16x128xf32>
    %c0_4 = arith.constant 0 : index
    %c1 = arith.constant 1 : index
    %5 = vector.load %arg3[%c0_4, %c1] : memref<16x2xf32, #tpu.memory_space<vmem>>, vector<16x1xf32>
    %6 = vector.broadcast %5 : vector<16x1xf32> to vector<16x128xf32>
    %7 = arith.mulf %4, %6 : vector<16x128xf32>
    %c0_5 = arith.constant 0 : index
    %c0_6 = arith.constant 0 : index
    %c0_7 = arith.constant 0 : index
    %8 = vector.load %arg4[%c0_5, %c0_6, %c0_7] : memref<1x16x128xf32, #tpu.memory_space<vmem>>, vector<1x16x128xf32>
    %9 = vector.shape_cast %8 : vector<1x16x128xf32> to vector<16x128xf32>
    %10 = vector.shape_cast %7 : vector<16x128xf32> to vector<1x16x128xf32>
    tpu.vector_store %arg4[%c0_5, %c0_6, %c0_7], %10 {strides = array<i32>} : memref<1x16x128xf32, #tpu.memory_space<vmem>>, vector<1x16x128xf32>,
    return
  }
  func.func @transform_0(%arg0: i32, %arg1: i32) -> (i32, i32, i32) {
    %c0_i32 = arith.constant 0 : i32
    %c0_i32_0 = arith.constant 0 : i32
    return %arg0, %arg1, %c0_i32 : i32, i32, i32
  }
  func.func @transform_1(%arg0: i32, %arg1: i32) -> (i32, i32) {
    %c0_i32 = arith.constant 0 : i32
    %c0_i32_0 = arith.constant 0 : i32
    return %arg1, %c0_i32 : i32, i32
  }
  func.func @transform_2(%arg0: i32, %arg1: i32) -> (i32, i32, i32) {
    %c0_i32 = arith.constant 0 : i32
    %c0_i32_0 = arith.constant 0 : i32
    return %arg0, %arg1, %c0_i32 : i32, i32, i32
  }
}

module attributes {stable_mosaic.version = 11 : i64} {
  func.func @_gs_fwd_kernel(%arg0: i32, %arg1: i32, %arg2: i32, %arg3: memref<1x16x16xbf16, #tpu.memory_space<vmem>>, %arg4: memref<1x16x128xbf16, #tpu.memory_space<vmem>>, %arg5: memref<1x128xf32, #tpu.memory_space<vmem>>, %arg6: memref<1x16x128xf32, #tpu.memory_space<vmem>>, %arg7: memref<1x16x2xf32, #tpu.memory_space<vmem>>, %arg8: memref<16x128xf32, #tpu.memory_space<vmem>>, %arg9: memref<16x1xf32, #tpu.memory_space<vmem>>) attributes {dimension_semantics = [#tpu.dimension_semantics<parallel>, #tpu.dimension_semantics<parallel>, #tpu.dimension_semantics<arbitrary>], iteration_bounds = array<i64: 2, 1, 1>, scalar_prefetch = 0 : i64, scratch_operands = 2 : i64, tpu.core_type = #tpu.core_type<tc>, window_params = [{transform_indices = @transform_0, window_bounds = array<i64: 1, 16, 16>}, {transform_indices = @transform_1, window_bounds = array<i64: 1, 16, 128>}, {pipeline_mode = #tpu.pipeline_mode<synchronous>, transform_indices = @transform_2, window_bounds = array<i64: 1, 128>}, {transform_indices = @transform_3, window_bounds = array<i64: 1, 16, 128>}, {transform_indices = @transform_4, window_bounds = array<i64: 1, 16, 2>}]} {
    %c0_i32 = arith.constant 0 : i32
    %0 = arith.cmpi eq, %arg2, %c0_i32 : i32
    %1 = arith.extui %0 : i1 to i32
    %c0_i32_0 = arith.constant 0 : i32
    %2 = arith.cmpi ne, %1, %c0_i32_0 : i32
    scf.if %2 {
      %cst_12 = arith.constant 0.000000e+00 : f32
      %14 = vector.broadcast %cst_12 : f32 to vector<16x128xf32>
      %c0_13 = arith.constant 0 : index
      %c0_14 = arith.constant 0 : index
      %15 = vector.load %arg8[%c0_13, %c0_14] : memref<16x128xf32, #tpu.memory_space<vmem>>, vector<16x128xf32>
      tpu.vector_store %arg8[%c0_13, %c0_14], %14 {strides = array<i32>} : memref<16x128xf32, #tpu.memory_space<vmem>>, vector<16x128xf32>,
    } else {
    }
    %c0 = arith.constant 0 : index
    %c0_1 = arith.constant 0 : index
    %c0_2 = arith.constant 0 : index
    %3 = vector.load %arg3[%c0, %c0_1, %c0_2] : memref<1x16x16xbf16, #tpu.memory_space<vmem>>, vector<1x16x16xbf16>
    %4 = vector.shape_cast %3 : vector<1x16x16xbf16> to vector<16x16xbf16>
    %c0_3 = arith.constant 0 : index
    %c0_4 = arith.constant 0 : index
    %5 = vector.load %arg8[%c0_3, %c0_4] : memref<16x128xf32, #tpu.memory_space<vmem>>, vector<16x128xf32>
    %c0_5 = arith.constant 0 : index
    %c0_6 = arith.constant 0 : index
    %c0_7 = arith.constant 0 : index
    %6 = vector.load %arg4[%c0_5, %c0_6, %c0_7] : memref<1x16x128xbf16, #tpu.memory_space<vmem>>, vector<1x16x128xbf16>
    %7 = vector.shape_cast %6 : vector<1x16x128xbf16> to vector<16x128xbf16>
    %cst = arith.constant dense<0.000000e+00> : vector<16x128xf32>
    %8 = tpu.matmul %4, %7, %cst {dimension_numbers = #tpu.dot_dimension_numbers<[1], [0], [0], [1], [0, 0, 1, 1], [], []>} : vector<16x16xbf16>, vector<16x128xbf16>, vector<16x128xf32> -> vector<16x128xf32>
    %9 = arith.addf %5, %8 : vector<16x128xf32>
    %c0_8 = arith.constant 0 : index
    %c0_9 = arith.constant 0 : index
    %10 = vector.load %arg8[%c0_8, %c0_9] : memref<16x128xf32, #tpu.memory_space<vmem>>, vector<16x128xf32>
    tpu.vector_store %arg8[%c0_8, %c0_9], %9 {strides = array<i32>} : memref<16x128xf32, #tpu.memory_space<vmem>>, vector<16x128xf32>,
    %c0_i32_10 = arith.constant 0 : i32
    %11 = arith.cmpi eq, %arg2, %c0_i32_10 : i32
    %12 = arith.extui %11 : i1 to i32
    %c0_i32_11 = arith.constant 0 : i32
    %13 = arith.cmpi ne, %12, %c0_i32_11 : i32
    scf.if %13 {
      %c0_12 = arith.constant 0 : index
      %c0_13 = arith.constant 0 : index
      %14 = vector.load %arg8[%c0_12, %c0_13] : memref<16x128xf32, #tpu.memory_space<vmem>>, vector<16x128xf32>
      %c0_14 = arith.constant 0 : index
      %c0_15 = arith.constant 0 : index
      %15 = vector.load %arg5[%c0_14, %c0_15] : memref<1x128xf32, #tpu.memory_space<vmem>>, vector<1x128xf32>
      %16 = vector.broadcast %15 : vector<1x128xf32> to vector<16x128xf32>
      %17 = arith.addf %14, %16 : vector<16x128xf32>
      %18 = arith.mulf %17, %17 : vector<16x128xf32>
      %cst_16 = arith.constant dense<0.000000e+00> : vector<16xf32>
      %19 = vector.multi_reduction <add>, %18, %cst_16 [1] : vector<16x128xf32> to vector<16xf32>
      %20 = vector.shape_cast %19 : vector<16xf32> to vector<16x1xf32>
      %cst_17 = arith.constant 1.000000e-24 : f32
      %21 = vector.broadcast %cst_17 : f32 to vector<16x1xf32>
      %22 = arith.maximumf %20, %21 : vector<16x1xf32>
      %23 = math.rsqrt %22 : vector<16x1xf32>
      %24 = vector.broadcast %23 : vector<16x1xf32> to vector<16x128xf32>
      %25 = arith.mulf %17, %24 : vector<16x128xf32>
      %cst_18 = arith.constant 0.000000e+00 : f32
      %26 = vector.broadcast %cst_18 : f32 to vector<16x128xf32>
      %27 = arith.maximumf %25, %26 : vector<16x128xf32>
      %c0_19 = arith.constant 0 : index
      %c0_20 = arith.constant 0 : index
      %c0_21 = arith.constant 0 : index
      %28 = vector.load %arg6[%c0_19, %c0_20, %c0_21] : memref<1x16x128xf32, #tpu.memory_space<vmem>>, vector<1x16x128xf32>
      %29 = vector.shape_cast %28 : vector<1x16x128xf32> to vector<16x128xf32>
      %30 = vector.shape_cast %27 : vector<16x128xf32> to vector<1x16x128xf32>
      tpu.vector_store %arg6[%c0_19, %c0_20, %c0_21], %30 {strides = array<i32>} : memref<1x16x128xf32, #tpu.memory_space<vmem>>, vector<1x16x128xf32>,
      %cst_22 = arith.constant dense<0.000000e+00> : vector<16xf32>
      %31 = vector.multi_reduction <add>, %27, %cst_22 [1] : vector<16x128xf32> to vector<16xf32>
      %32 = vector.shape_cast %31 : vector<16xf32> to vector<16x1xf32>
      %c0_23 = arith.constant 0 : index
      %c0_24 = arith.constant 0 : index
      %c0_25 = arith.constant 0 : index
      %33 = vector.load %arg7[%c0_23, %c0_24, %c0_25] : memref<1x16x2xf32, #tpu.memory_space<vmem>>, vector<1x16x1xf32>
      %34 = vector.shape_cast %33 : vector<1x16x1xf32> to vector<16x1xf32>
      %35 = vector.shape_cast %32 : vector<16x1xf32> to vector<1x16x1xf32>
      tpu.vector_store %arg7[%c0_23, %c0_24, %c0_25], %35 {strides = array<i32>} : memref<1x16x2xf32, #tpu.memory_space<vmem>>, vector<1x16x1xf32>,
      %36 = arith.mulf %27, %27 : vector<16x128xf32>
      %cst_26 = arith.constant dense<0.000000e+00> : vector<16xf32>
      %37 = vector.multi_reduction <add>, %36, %cst_26 [1] : vector<16x128xf32> to vector<16xf32>
      %38 = vector.shape_cast %37 : vector<16xf32> to vector<16x1xf32>
      %c0_27 = arith.constant 0 : index
      %c0_28 = arith.constant 0 : index
      %c1 = arith.constant 1 : index
      %39 = vector.load %arg7[%c0_27, %c0_28, %c1] : memref<1x16x2xf32, #tpu.memory_space<vmem>>, vector<1x16x1xf32>
      %40 = vector.shape_cast %39 : vector<1x16x1xf32> to vector<16x1xf32>
      %41 = vector.shape_cast %38 : vector<16x1xf32> to vector<1x16x1xf32>
      tpu.vector_store %arg7[%c0_27, %c0_28, %c1], %41 {strides = array<i32>} : memref<1x16x2xf32, #tpu.memory_space<vmem>>, vector<1x16x1xf32>,
    } else {
    }
    return
  }
  func.func @transform_0(%arg0: i32, %arg1: i32, %arg2: i32) -> (i32, i32, i32) {
    %c0_i32 = arith.constant 0 : i32
    return %arg0, %arg1, %arg2 : i32, i32, i32
  }
  func.func @transform_1(%arg0: i32, %arg1: i32, %arg2: i32) -> (i32, i32, i32) {
    %c0_i32 = arith.constant 0 : i32
    %c0_i32_0 = arith.constant 0 : i32
    return %arg0, %arg2, %c0_i32 : i32, i32, i32
  }
  func.func @transform_2(%arg0: i32, %arg1: i32, %arg2: i32) -> (i32, i32) {
    %c0_i32 = arith.constant 0 : i32
    %c0_i32_0 = arith.constant 0 : i32
    %c0_i32_1 = arith.constant 0 : i32
    return %c0_i32, %c0_i32_0 : i32, i32
  }
  func.func @transform_3(%arg0: i32, %arg1: i32, %arg2: i32) -> (i32, i32, i32) {
    %c0_i32 = arith.constant 0 : i32
    %c0_i32_0 = arith.constant 0 : i32
    return %arg0, %arg1, %c0_i32 : i32, i32, i32
  }
  func.func @transform_4(%arg0: i32, %arg1: i32, %arg2: i32) -> (i32, i32, i32) {
    %c0_i32 = arith.constant 0 : i32
    %c0_i32_0 = arith.constant 0 : i32
    return %arg0, %arg1, %c0_i32 : i32, i32, i32
  }
}

</mosaic_0001>

<llo_original>
// kernel: batched_graphsage.3
$region0: #{batched_graphsage.3}
  #allocation0 [shape = 'u32[]', space=smem, size = 0x4, offset = 0x4, fixed_abs, tag = 'smem constant byte address 0x4 - core index']
  #allocation1 [shape = 'u32[144,128]{1,0:T(1,128)}', space=vmem, size = 0x12000, scoped, tag = 'internal scratch']
  %s0 = inlined_call_operand.vmem [shape: f32[2,16,128], index: 0, kind: input, shape index: {}, may-alias: {0,2}]
  %s1 = inlined_call_operand.vmem [shape: f32[16,2], index: 1, kind: input, shape index: {}]
  %s2 = inlined_call_operand.vmem [shape: f32[2,16,128], index: 2, kind: output, shape index: {}, may-alias: {0,2}]
  %s3 = sld [smem:[#allocation0]]
  $region41: #{batched_graphsage.3} parent=0
    _
  %s5 = ssub.s32 1, %s3
  %s6 = scalar_select 0, %s5, %s3
  loop: start=0, step=1, limit=4
  $region2: #{batched_graphsage.3} parent=0 // loop_pre_header
    _
  $region3: #{batched_graphsage.3} parent=0 // loop_header
    %s8 = sphi 0, %s12
    %p9 = scmp.ge.s32.totalorder %s8, 4
    %s15 = sphi 0, %s27
    %s16 = sphi 0, %s23
    %s17 = sphi 0, %s15
    %s18 = sphi 0, %s16
    %s19 = sphi 0, %s17
    %s20 = sphi 0, %s18
    %s32 = sphi 0, %s34
    %s35 = sphi 0, %s32
    %s36 = sphi 0, %s35
    %s52 = sphi 0, %s36
    %s58 = sphi 0, %s60
    %s61 = sphi 0, %s58
    %s62 = sphi 0, %s61
    %s78 = sphi 0, %s62
    %s86 = sphi 0, %s88
    %s89 = sphi 0, %s86
    %s90 = sphi 0, %s89
    %s106 = sphi 0, %s90
  $region4: #{batched_graphsage.3} parent=0 // loop_header_branch
    %11 = sbr.rel (%p9) target = $region8
  $region5: #{batched_graphsage.3} parent=0 // loop_body
    %s13 = ssub.s32 %s8, 1
    %s14 = ssub.s32 %s8, 2
    %s21 = sadd.s32 1, %s16
    %p22 = scmp.ge.s32.totalorder %s21, 1
    %s23 = scalar_select %p22, 0, %s21
    %s24 = sadd.s32 1, %s15
    %s25 = scalar_select %p22, %s24, %s15
    %p26 = scmp.ge.s32.totalorder %s25, 2
    %s27 = scalar_select %p26, 0, %s25
    %s28 = ssub.s32 %s15, %s27
    %s29 = ssub.s32 %s16, %s23
    %s30 = sor.u32 %s28, %s29
    %p31 = scmp.eq.s32.totalorder %s30, 0
    %s33 = sadd.s32 %s32, 1
    %s34 = scalar_select %p31, %s32, %s33
    %p37 = pneg %p31
    %p38 = scmp.eq.s32.totalorder %s8, 1
    %p39 = por %p37, %p38
    %p40 = scmp.ne.s32.totalorder %s32, %s35
    %p41 = scmp.eq.s32.totalorder %s8, 0
    %p42 = por %p40, %p41
    %p43 = scmp.ne.s32.totalorder %s32, %s35
    %p44 = scmp.eq.s32.totalorder %s13, 1
    %p45 = por %p43, %p44
    %p46 = scmp.ne.s32.totalorder %s35, %s36
    %p47 = scmp.eq.s32.totalorder %s13, 0
    %p48 = por %p46, %p47
    %p49 = scmp.ne.s32.totalorder %s35, %s36
    %p50 = scmp.eq.s32.totalorder %s14, 1
    %p51 = por %p49, %p50
    %p53 = scmp.ne.s32.totalorder %s36, %s52
    %p54 = scmp.eq.s32.totalorder %s14, 0
    %p55 = por %p53, %p54
    %s56 = ssub.s32 %s16, %s23
    %p57 = scmp.eq.s32.totalorder %s56, 0
    %s59 = sadd.s32 %s58, 1
    %s60 = scalar_select %p57, %s58, %s59
    %p63 = pneg %p57
    %p64 = scmp.eq.s32.totalorder %s8, 1
    %p65 = por %p63, %p64
    %p66 = scmp.ne.s32.totalorder %s58, %s61
    %p67 = scmp.eq.s32.totalorder %s8, 0
    %p68 = por %p66, %p67
    %p69 = scmp.ne.s32.totalorder %s58, %s61
    %p70 = scmp.eq.s32.totalorder %s13, 1
    %p71 = por %p69, %p70
    %p72 = scmp.ne.s32.totalorder %s61, %s62
    %p73 = scmp.eq.s32.totalorder %s13, 0
    %p74 = por %p72, %p73
    %p75 = scmp.ne.s32.totalorder %s61, %s62
    %p76 = scmp.eq.s32.totalorder %s14, 1
    %p77 = por %p75, %p76
    %p79 = scmp.ne.s32.totalorder %s62, %s78
    %p80 = scmp.eq.s32.totalorder %s14, 0
    %p81 = por %p79, %p80
    %s82 = ssub.s32 %s15, %s27
    %s83 = ssub.s32 %s16, %s23
    %s84 = sor.u32 %s82, %s83
    %p85 = scmp.eq.s32.totalorder %s84, 0
    %s87 = sadd.s32 %s86, 1
    %s88 = scalar_select %p85, %s86, %s87
    %p91 = pneg %p85
    %p92 = scmp.eq.s32.totalorder %s8, 1
    %p93 = por %p91, %p92
    %p94 = scmp.ne.s32.totalorder %s86, %s89
    %p95 = scmp.eq.s32.totalorder %s8, 0
    %p96 = por %p94, %p95
    %p97 = scmp.ne.s32.totalorder %s86, %s89
    %p98 = scmp.eq.s32.totalorder %s13, 1
    %p99 = por %p97, %p98
    %p100 = scmp.ne.s32.totalorder %s89, %s90
    %p101 = scmp.eq.s32.totalorder %s13, 0
    %p102 = por %p100, %p101
    %p103 = scmp.ne.s32.totalorder %s89, %s90
    %p104 = scmp.eq.s32.totalorder %s14, 1
    %p105 = por %p103, %p104
    %p107 = scmp.ne.s32.totalorder %s90, %s106
    %p108 = scmp.eq.s32.totalorder %s14, 0
    %p109 = por %p107, %p108
    %p110 = scmp.le.s32.totalorder 1, %s8
    %p111 = scmp.lt.s32.totalorder %s8, 3
    %p112 = pnand %p110, %p111
    %p113 = pneg %p112
    // Predicated region
    $region9: #{batched_graphsage.3} parent=5 // pred_check
      _
    $region10: #{batched_graphsage.3} parent=5 // pred_check_branch
      %115 = sbr.rel (%p112) target = $region12
    $region11: #{batched_graphsage.3} parent=5 // pred_region
      %s116 = ssub.s32 %s8, 1
      // Predicated region
      $region13: #{batched_graphsage.3} parent=11 // pred_check
        %p117 = pneg %p74
      $region14: #{batched_graphsage.3} parent=11 // pred_check_branch
        %119 = sbr.rel (%p117) target = $region16
      $region15: #{batched_graphsage.3} parent=11 // pred_region
        %s120 = smul.u32 2, %s18
        %p121 = scmp.lt.s32.totalorder %s120, 1
        %s122 = scalar_select %p121, %s120, 1
        %s123 = smul.addr %s122, 8
        %s124 = scalar_lea.vmem %s1, %s123
        %s125 = smul.u32 2, %s18
      $region16: #{batched_graphsage.3} parent=11 // pred_fallthru
        _
    $region12: #{batched_graphsage.3} parent=5 // pred_fallthru
      _
    %p126 = scmp.lt.s32.totalorder %s8, 2
    // Predicated region
    $region17: #{batched_graphsage.3} parent=5 // pred_check
      %p127 = pneg %p126
    $region18: #{batched_graphsage.3} parent=5 // pred_check_branch
      %129 = sbr.rel (%p127) target = $region20
    $region19: #{batched_graphsage.3} parent=5 // pred_region
      // Predicated region
      $region21: #{batched_graphsage.3} parent=19 // pred_check
        %p130 = pneg %p42
      $region22: #{batched_graphsage.3} parent=19 // pred_check_branch
        %132 = sbr.rel (%p130) target = $region24
      $region23: #{batched_graphsage.3} parent=19 // pred_region
        %s133 = smul.u32 2, %s16
        %p134 = scmp.lt.s32.totalorder %s15, 1
        %s135 = scalar_select %p134, %s15, 1
        %p136 = scmp.lt.s32.totalorder %s133, 1
        %s137 = scalar_select %p136, %s133, 1
        %s138 = smul.addr %s135, 2
        %s139 = sadd.s32 %s137, %s138
        %s140 = smul.addr %s139, 8
        %s141 = scalar_lea.vmem %s0, %s140
        %s142 = smul.u32 2, %s16
      $region24: #{batched_graphsage.3} parent=19 // pred_fallthru
        _
    $region20: #{batched_graphsage.3} parent=5 // pred_fallthru
      _
    %p143 = scmp.le.s32.totalorder 1, %s8
    %p144 = scmp.lt.s32.totalorder %s8, 3
    %p145 = pnand %p143, %p144
    %p146 = pneg %p145
    // Predicated region
    $region25: #{batched_graphsage.3} parent=5 // pred_check
      _
    $region26: #{batched_graphsage.3} parent=5 // pred_check_branch
      %148 = sbr.rel (%p145) target = $region28
    $region27: #{batched_graphsage.3} parent=5 // pred_region
      %s149 = ssub.s32 %s8, 1
      %s150 = smul.u32 2, %s18
      %p151 = scmp.lt.s32.totalorder %s17, 1
      %s152 = scalar_select %p151, %s17, 1
      %p153 = scmp.lt.s32.totalorder %s150, 1
      %s154 = scalar_select %p153, %s150, 1
      %s155 = smul.addr %s152, 2
      %s156 = sadd.s32 %s154, %s155
      %s157 = smul.addr %s156, 8
      %s158 = scalar_lea.vmem %s0, %s157
      %p159 = pneg %p48
      %p160 = pneg %p45
      %s161 = smul.u32 2, %s18
      %p162 = scmp.lt.s32.totalorder %s161, 1
      %s163 = scalar_select %p162, %s161, 1
      %s164 = smul.addr %s163, 8
      %s165 = scalar_lea.vmem %s1, %s164
      %p166 = pneg %p74
      %p167 = pneg %p71
      %p168 = pneg %p102
      %p169 = pneg %p99
      %s170 = smul.u32 2, %s18
      %p171 = scmp.lt.s32.totalorder %s17, 1
      %s172 = scalar_select %p171, %s17, 1
      %p173 = scmp.lt.s32.totalorder %s170, 1
      %s174 = scalar_select %p173, %s170, 1
      %s175 = smul.addr %s172, 2
      %s176 = sadd.s32 %s174, %s175
      %s177 = smul.addr %s176, 8
      %s178 = scalar_lea.vmem %s2, %s177
      %s179 = smul.u32 2, %s18
      %p180 = scmp.lt.s32.totalorder %s17, 1
      %s181 = scalar_select %p180, %s17, 1
      %p182 = scmp.lt.s32.totalorder %s179, 1
      %s183 = scalar_select %p182, %s179, 1
      %s184 = smul.addr %s181, 2
      %s185 = sadd.s32 %s183, %s184
      %s186 = smul.addr %s185, 8
      %s187 = scalar_lea.vmem %s0, %s186
      %s188 = smul.u32 2, %s18
      %s189 = smul.u32 2, %s18
      %p190 = scmp.lt.s32.totalorder %s189, 1
      %s191 = scalar_select %p190, %s189, 1
      %s192 = smul.addr %s191, 8
      %s193 = scalar_lea.vmem %s1, %s192
      %s194 = smul.u32 2, %s18
      %s195 = smul.u32 2, %s18
      %p196 = scmp.lt.s32.totalorder %s17, 1
      %s197 = scalar_select %p196, %s17, 1
      %p198 = scmp.lt.s32.totalorder %s195, 1
      %s199 = scalar_select %p198, %s195, 1
      %s200 = smul.addr %s197, 2
      %s201 = sadd.s32 %s199, %s200
      %s202 = smul.addr %s201, 8
      %s203 = scalar_lea.vmem %s2, %s202
      %s204 = smul.u32 2, %s18
      %v205 = vld [vmem:[%s187] sm:$0xff]
      %v206 = vld [vmem:[%s187 + $0x8] sm:$0xff]
      %v207 = vld [vmem:[%s193] sm:$0xff]
      %v208 = vld [vmem:[%s193 + $0x8] sm:$0xff]
      %210 = vset.pattern.permute.xlu0 0
      %211 = vperm.xlu0 %210, %v207
      %v212 = vpop.permute.xlu0 %211
      %215 = vset.pattern.permute.xlu0 0
      %216 = vperm.xlu0 %215, %v208
      %v217 = vpop.permute.xlu0 %216
      %v219 = vsub.f32 %v205, %v212
      %v220 = vsub.f32 %v206, %v217
      %221 = vset.pattern.permute.xlu0 1
      %222 = vperm.xlu0 %221, %v207
      %v223 = vpop.permute.xlu0 %222
      %225 = vset.pattern.permute.xlu0 1
      %226 = vperm.xlu0 %225, %v208
      %v227 = vpop.permute.xlu0 %226
      %v229 = vmul.f32 %v219, %v223
      %v230 = vmul.f32 %v220, %v227
      %231 = vst [vmem:[%s203] sm:$0xff] %v229
      %232 = vst [vmem:[%s203 + $0x8] sm:$0xff] %v230
      %s233 = smul.u32 2, %s18
      %p234 = scmp.lt.s32.totalorder %s17, 1
      %s235 = scalar_select %p234, %s17, 1
      %p236 = scmp.lt.s32.totalorder %s233, 1
      %s237 = scalar_select %p236, %s233, 1
      %s238 = smul.addr %s235, 2
      %s239 = sadd.s32 %s237, %s238
      %s240 = smul.addr %s239, 8
      %s241 = scalar_lea.vmem %s2, %s240
      // Predicated region
      $region29: #{batched_graphsage.3} parent=27 // pred_check
        %p242 = pneg %p99
      $region30: #{batched_graphsage.3} parent=27 // pred_check_branch
        %244 = sbr.rel (%p242) target = $region32
      $region31: #{batched_graphsage.3} parent=27 // pred_region
        %s245 = smul.u32 2, %s18
      $region32: #{batched_graphsage.3} parent=27 // pred_fallthru
        _
    $region28: #{batched_graphsage.3} parent=5 // pred_fallthru
      _
    %p246 = scmp.le.s32.totalorder 2, %s8
    // Predicated region
    $region33: #{batched_graphsage.3} parent=5 // pred_check
      %p247 = pneg %p246
    $region34: #{batched_graphsage.3} parent=5 // pred_check_branch
      %249 = sbr.rel (%p247) target = $region36
    $region35: #{batched_graphsage.3} parent=5 // pred_region
      %s250 = ssub.s32 %s8, 2
      // Predicated region
      $region37: #{batched_graphsage.3} parent=35 // pred_check
        %p251 = pneg %p105
      $region38: #{batched_graphsage.3} parent=35 // pred_check_branch
        %253 = sbr.rel (%p251) target = $region40
      $region39: #{batched_graphsage.3} parent=35 // pred_region
        %s254 = smul.u32 2, %s20
        %p255 = scmp.lt.s32.totalorder %s19, 1
        %s256 = scalar_select %p255, %s19, 1
        %p257 = scmp.lt.s32.totalorder %s254, 1
        %s258 = scalar_select %p257, %s254, 1
        %s259 = smul.addr %s256, 2
        %s260 = sadd.s32 %s258, %s259
        %s261 = smul.addr %s260, 8
        %s262 = scalar_lea.vmem %s2, %s261
      $region40: #{batched_graphsage.3} parent=35 // pred_fallthru
        _
    $region36: #{batched_graphsage.3} parent=5 // pred_fallthru
      _
  $region6: #{batched_graphsage.3} parent=0 // loop_footer
    %s12 = sadd.s32 1, %s8
  $region7: #{batched_graphsage.3} parent=0 // loop_footer_branch
    %7 = sbr.rel target = $region3
  $region8: #{batched_graphsage.3} parent=0 // loop_exit
    _

// kernel: batched_graphsage.2
$region0: #{batched_graphsage.2}
  #allocation0 [shape = 'u32[]', space=smem, size = 0x4, offset = 0x4, fixed_abs, tag = 'smem constant byte address 0x4 - core index']
  #allocation1 [shape = 'u32[144,128]{1,0:T(1,128)}', space=vmem, size = 0x12000, scoped, tag = 'internal scratch']
  #allocation2 [shape = 'f32[16,128]{1,0:T(8,128)}', space=vmem, size = 0x2000, scoped, tag = 'scratch operand']
  #allocation3 [shape = 'f32[16,1]{1,0:T(8,128)}', space=vmem, size = 0x2000, scoped, tag = 'scratch operand']
  %s0 = inlined_call_operand.vmem [shape: bf16[2,16,16], index: 0, kind: input, shape index: {}]
  %s1 = inlined_call_operand.vmem [shape: bf16[2,16,128], index: 1, kind: input, shape index: {}]
  %s2 = inlined_call_operand.vmem [shape: f32[1,128], index: 2, kind: input, shape index: {}]
  %s3 = inlined_call_operand.vmem [shape: f32[2,16,128], index: 3, kind: output, shape index: {0}]
  %s4 = inlined_call_operand.vmem [shape: f32[2,16,2], index: 4, kind: output, shape index: {1}]
  %5 = xla_tuple %s3, %s4
  %s6 = sld [smem:[#allocation0]]
  $region61: #{batched_graphsage.2} parent=0
    _
  %s8 = ssub.s32 1, %s6
  %s9 = scalar_select 0, %s8, %s6
  loop: start=0, step=1, limit=4
  $region2: #{batched_graphsage.2} parent=0 // loop_pre_header
    _
  $region3: #{batched_graphsage.2} parent=0 // loop_header
    %s11 = sphi 0, %s15
    %p12 = scmp.ge.s32.totalorder %s11, 4
    %s18 = sphi 0, %s37
    %s19 = sphi 0, %s33
    %s20 = sphi 0, %s29
    %s21 = sphi 0, %s18
    %s22 = sphi 0, %s19
    %s23 = sphi 0, %s20
    %s24 = sphi 0, %s21
    %s25 = sphi 0, %s22
    %s26 = sphi 0, %s23
    %s44 = sphi 0, %s46
    %s47 = sphi 0, %s44
    %s48 = sphi 0, %s47
    %s64 = sphi 0, %s48
    %s72 = sphi 0, %s74
    %s75 = sphi 0, %s72
    %s76 = sphi 0, %s75
    %s92 = sphi 0, %s76
    %s96 = sphi 0, %s96
    %s98 = sphi 0, %s96
    %s99 = sphi 0, %s98
    %s113 = sphi 0, %s99
    %s121 = sphi 0, %s123
    %s124 = sphi 0, %s121
    %s125 = sphi 0, %s124
    %s141 = sphi 0, %s125
    %s149 = sphi 0, %s151
    %s152 = sphi 0, %s149
    %s153 = sphi 0, %s152
    %s169 = sphi 0, %s153
  $region4: #{batched_graphsage.2} parent=0 // loop_header_branch
    %14 = sbr.rel (%p12) target = $region8
  $region5: #{batched_graphsage.2} parent=0 // loop_body
    %s16 = ssub.s32 %s11, 1
    %s17 = ssub.s32 %s11, 2
    %s27 = sadd.s32 1, %s20
    %p28 = scmp.ge.s32.totalorder %s27, 1
    %s29 = scalar_select %p28, 0, %s27
    %s30 = sadd.s32 1, %s19
    %s31 = scalar_select %p28, %s30, %s19
    %p32 = scmp.ge.s32.totalorder %s31, 1
    %s33 = scalar_select %p32, 0, %s31
    %s34 = sadd.s32 1, %s18
    %s35 = scalar_select %p32, %s34, %s18
    %p36 = scmp.ge.s32.totalorder %s35, 2
    %s37 = scalar_select %p36, 0, %s35
    %s38 = ssub.s32 %s18, %s37
    %s39 = ssub.s32 %s19, %s33
    %s40 = sor.u32 %s38, %s39
    %s41 = ssub.s32 %s20, %s29
    %s42 = sor.u32 %s40, %s41
    %p43 = scmp.eq.s32.totalorder %s42, 0
    %s45 = sadd.s32 %s44, 1
    %s46 = scalar_select %p43, %s44, %s45
    %p49 = pneg %p43
    %p50 = scmp.eq.s32.totalorder %s11, 1
    %p51 = por %p49, %p50
    %p52 = scmp.ne.s32.totalorder %s44, %s47
    %p53 = scmp.eq.s32.totalorder %s11, 0
    %p54 = por %p52, %p53
    %p55 = scmp.ne.s32.totalorder %s44, %s47
    %p56 = scmp.eq.s32.totalorder %s16, 1
    %p57 = por %p55, %p56
    %p58 = scmp.ne.s32.totalorder %s47, %s48
    %p59 = scmp.eq.s32.totalorder %s16, 0
    %p60 = por %p58, %p59
    %p61 = scmp.ne.s32.totalorder %s47, %s48
    %p62 = scmp.eq.s32.totalorder %s17, 1
    %p63 = por %p61, %p62
    %p65 = scmp.ne.s32.totalorder %s48, %s64
    %p66 = scmp.eq.s32.totalorder %s17, 0
    %p67 = por %p65, %p66
    %s68 = ssub.s32 %s18, %s37
    %s69 = ssub.s32 %s20, %s29
    %s70 = sor.u32 %s68, %s69
    %p71 = scmp.eq.s32.totalorder %s70, 0
    %s73 = sadd.s32 %s72, 1
    %s74 = scalar_select %p71, %s72, %s73
    %p77 = pneg %p71
    %p78 = scmp.eq.s32.totalorder %s11, 1
    %p79 = por %p77, %p78
    %p80 = scmp.ne.s32.totalorder %s72, %s75
    %p81 = scmp.eq.s32.totalorder %s11, 0
    %p82 = por %p80, %p81
    %p83 = scmp.ne.s32.totalorder %s72, %s75
    %p84 = scmp.eq.s32.totalorder %s16, 1
    %p85 = por %p83, %p84
    %p86 = scmp.ne.s32.totalorder %s75, %s76
    %p87 = scmp.eq.s32.totalorder %s16, 0
    %p88 = por %p86, %p87
    %p89 = scmp.ne.s32.totalorder %s75, %s76
    %p90 = scmp.eq.s32.totalorder %s17, 1
    %p91 = por %p89, %p90
    %p93 = scmp.ne.s32.totalorder %s76, %s92
    %p94 = scmp.eq.s32.totalorder %s17, 0
    %p95 = por %p93, %p94
    %s97 = sadd.s32 %s96, 1
    %p100 = scmp.eq.s32.totalorder %s11, 1
    %p101 = scmp.ne.s32.totalorder %s96, %s98
    %p102 = scmp.eq.s32.totalorder %s11, 0
    %p103 = por %p101, %p102
    %p104 = scmp.ne.s32.totalorder %s96, %s98
    %p105 = scmp.eq.s32.totalorder %s16, 1
    %p106 = por %p104, %p105
    %p107 = scmp.ne.s32.totalorder %s98, %s99
    %p108 = scmp.eq.s32.totalorder %s16, 0
    %p109 = por %p107, %p108
    %p110 = scmp.ne.s32.totalorder %s98, %s99
    %p111 = scmp.eq.s32.totalorder %s17, 1
    %p112 = por %p110, %p111
    %p114 = scmp.ne.s32.totalorder %s99, %s113
    %p115 = scmp.eq.s32.totalorder %s17, 0
    %p116 = por %p114, %p115
    %s117 = ssub.s32 %s18, %s37
    %s118 = ssub.s32 %s19, %s33
    %s119 = sor.u32 %s117, %s118
    %p120 = scmp.eq.s32.totalorder %s119, 0
    %s122 = sadd.s32 %s121, 1
    %s123 = scalar_select %p120, %s121, %s122
    %p126 = pneg %p120
    %p127 = scmp.eq.s32.totalorder %s11, 1
    %p128 = por %p126, %p127
    %p129 = scmp.ne.s32.totalorder %s121, %s124
    %p130 = scmp.eq.s32.totalorder %s11, 0
    %p131 = por %p129, %p130
    %p132 = scmp.ne.s32.totalorder %s121, %s124
    %p133 = scmp.eq.s32.totalorder %s16, 1
    %p134 = por %p132, %p133
    %p135 = scmp.ne.s32.totalorder %s124, %s125
    %p136 = scmp.eq.s32.totalorder %s16, 0
    %p137 = por %p135, %p136
    %p138 = scmp.ne.s32.totalorder %s124, %s125
    %p139 = scmp.eq.s32.totalorder %s17, 1
    %p140 = por %p138, %p139
    %p142 = scmp.ne.s32.totalorder %s125, %s141
    %p143 = scmp.eq.s32.totalorder %s17, 0
    %p144 = por %p142, %p143
    %s145 = ssub.s32 %s18, %s37
    %s146 = ssub.s32 %s19, %s33
    %s147 = sor.u32 %s145, %s146
    %p148 = scmp.eq.s32.totalorder %s147, 0
    %s150 = sadd.s32 %s149, 1
    %s151 = scalar_select %p148, %s149, %s150
    %p154 = pneg %p148
    %p155 = scmp.eq.s32.totalorder %s11, 1
    %p156 = por %p154, %p155
    %p157 = scmp.ne.s32.totalorder %s149, %s152
    %p158 = scmp.eq.s32.totalorder %s11, 0
    %p159 = por %p157, %p158
    %p160 = scmp.ne.s32.totalorder %s149, %s152
    %p161 = scmp.eq.s32.totalorder %s16, 1
    %p162 = por %p160, %p161
    %p163 = scmp.ne.s32.totalorder %s152, %s153
    %p164 = scmp.eq.s32.totalorder %s16, 0
    %p165 = por %p163, %p164
    %p166 = scmp.ne.s32.totalorder %s152, %s153
    %p167 = scmp.eq.s32.totalorder %s17, 1
    %p168 = por %p166, %p167
    %p170 = scmp.ne.s32.totalorder %s153, %s169
    %p171 = scmp.eq.s32.totalorder %s17, 0
    %p172 = por %p170, %p171
    %p173 = scmp.le.s32.totalorder 1, %s11
    %p174 = scmp.lt.s32.totalorder %s11, 3
    %p175 = pnand %p173, %p174
    %p176 = pneg %p175
    // Predicated region
    $region9: #{batched_graphsage.2} parent=5 // pred_check
      _
    $region10: #{batched_graphsage.2} parent=5 // pred_check_branch
      %178 = sbr.rel (%p175) target = $region12
    $region11: #{batched_graphsage.2} parent=5 // pred_region
      %s179 = ssub.s32 %s11, 1
      // Predicated region
      $region13: #{batched_graphsage.2} parent=11 // pred_check
        %p180 = pneg %p109
      $region14: #{batched_graphsage.2} parent=11 // pred_check_branch
        %182 = sbr.rel (%p180) target = $region16
      $region15: #{batched_graphsage.2} parent=11 // pred_region
        _
      $region16: #{batched_graphsage.2} parent=11 // pred_fallthru
        _
    $region12: #{batched_graphsage.2} parent=5 // pred_fallthru
      _
    %p183 = scmp.lt.s32.totalorder %s11, 2
    // Predicated region
    $region17: #{batched_graphsage.2} parent=5 // pred_check
      %p184 = pneg %p183
    $region18: #{batched_graphsage.2} parent=5 // pred_check_branch
      %186 = sbr.rel (%p184) target = $region20
    $region19: #{batched_graphsage.2} parent=5 // pred_region
      // Predicated region
      $region21: #{batched_graphsage.2} parent=19 // pred_check
        %p187 = pneg %p54
      $region22: #{batched_graphsage.2} parent=19 // pred_check_branch
        %189 = sbr.rel (%p187) target = $region24
      $region23: #{batched_graphsage.2} parent=19 // pred_region
        %s190 = smul.u32 2, %s19
        %p191 = scmp.lt.s32.totalorder %s18, 1
        %s192 = scalar_select %p191, %s18, 1
        %p193 = scmp.lt.s32.totalorder %s190, 1
        %s194 = scalar_select %p193, %s190, 1
        %p195 = scmp.lt.s32.totalorder %s20, 0
        %s196 = scalar_select %p195, %s20, 0
        %s197 = sadd.s32 %s196, %s194
        %s198 = smul.addr %s192, 2
        %s199 = sadd.s32 %s197, %s198
        %s200 = smul.addr %s199, 4
        %s201 = scalar_lea.vmem %s0, %s200
        %s202 = smul.u32 2, %s19
      $region24: #{batched_graphsage.2} parent=19 // pred_fallthru
        _
      // Predicated region
      $region25: #{batched_graphsage.2} parent=19 // pred_check
        %p203 = pneg %p82
      $region26: #{batched_graphsage.2} parent=19 // pred_check_branch
        %205 = sbr.rel (%p203) target = $region28
      $region27: #{batched_graphsage.2} parent=19 // pred_region
        %s206 = smul.u32 2, %s20
        %p207 = scmp.lt.s32.totalorder %s18, 1
        %s208 = scalar_select %p207, %s18, 1
        %p209 = scmp.lt.s32.totalorder %s206, 1
        %s210 = scalar_select %p209, %s206, 1
        %s211 = smul.addr %s208, 2
        %s212 = sadd.s32 %s210, %s211
        %s213 = smul.addr %s212, 4
        %s214 = scalar_lea.vmem %s1, %s213
        %s215 = smul.u32 2, %s20
      $region28: #{batched_graphsage.2} parent=19 // pred_fallthru
        _
    $region20: #{batched_graphsage.2} parent=5 // pred_fallthru
      _
    %p216 = scmp.le.s32.totalorder 1, %s11
    %p217 = scmp.lt.s32.totalorder %s11, 3
    %p218 = pnand %p216, %p217
    %p219 = pneg %p218
    // Predicated region
    $region29: #{batched_graphsage.2} parent=5 // pred_check
      _
    $region30: #{batched_graphsage.2} parent=5 // pred_check_branch
      %221 = sbr.rel (%p218) target = $region32
    $region31: #{batched_graphsage.2} parent=5 // pred_region
      %s222 = ssub.s32 %s11, 1
      %s223 = smul.u32 2, %s22
      %p224 = scmp.lt.s32.totalorder %s21, 1
      %s225 = scalar_select %p224, %s21, 1
      %p226 = scmp.lt.s32.totalorder %s223, 1
      %s227 = scalar_select %p226, %s223, 1
      %p228 = scmp.lt.s32.totalorder %s23, 0
      %s229 = scalar_select %p228, %s23, 0
      %s230 = sadd.s32 %s229, %s227
      %s231 = smul.addr %s225, 2
      %s232 = sadd.s32 %s230, %s231
      %s233 = smul.addr %s232, 4
      %s234 = scalar_lea.vmem %s0, %s233
      %p235 = pneg %p60
      %p236 = pneg %p57
      %s237 = smul.u32 2, %s23
      %p238 = scmp.lt.s32.totalorder %s21, 1
      %s239 = scalar_select %p238, %s21, 1
      %p240 = scmp.lt.s32.totalorder %s237, 1
      %s241 = scalar_select %p240, %s237, 1
      %s242 = smul.addr %s239, 2
      %s243 = sadd.s32 %s241, %s242
      %s244 = smul.addr %s243, 4
      %s245 = scalar_lea.vmem %s1, %s244
      %p246 = pneg %p88
      %p247 = pneg %p85
      %p248 = pneg %p109
      %p249 = pneg %p106
      %p250 = pneg %p137
      %p251 = pneg %p134
      %s252 = smul.u32 2, %s22
      %p253 = scmp.lt.s32.totalorder %s21, 1
      %s254 = scalar_select %p253, %s21, 1
      %p255 = scmp.lt.s32.totalorder %s252, 1
      %s256 = scalar_select %p255, %s252, 1
      %s257 = smul.addr %s254, 2
      %s258 = sadd.s32 %s256, %s257
      %s259 = smul.addr %s258, 8
      %s260 = scalar_lea.vmem %s3, %s259
      %p261 = pneg %p165
      %p262 = pneg %p162
      %s263 = smul.u32 2, %s22
      %p264 = scmp.lt.s32.totalorder %s21, 1
      %s265 = scalar_select %p264, %s21, 1
      %p266 = scmp.lt.s32.totalorder %s263, 1
      %s267 = scalar_select %p266, %s263, 1
      %s268 = smul.addr %s265, 2
      %s269 = sadd.s32 %s267, %s268
      %s270 = smul.addr %s269, 8
      %s271 = scalar_lea.vmem %s4, %s270
      %s272 = smul.u32 2, %s22
      %p273 = scmp.lt.s32.totalorder %s21, 1
      %s274 = scalar_select %p273, %s21, 1
      %p275 = scmp.lt.s32.totalorder %s272, 1
      %s276 = scalar_select %p275, %s272, 1
      %p277 = scmp.lt.s32.totalorder %s23, 0
      %s278 = scalar_select %p277, %s23, 0
      %s279 = sadd.s32 %s278, %s276
      %s280 = smul.addr %s274, 2
      %s281 = sadd.s32 %s279, %s280
      %s282 = smul.addr %s281, 4
      %s283 = scalar_lea.vmem %s0, %s282
      %s284 = smul.u32 2, %s22
      %s285 = smul.u32 2, %s23
      %p286 = scmp.lt.s32.totalorder %s21, 1
      %s287 = scalar_select %p286, %s21, 1
      %p288 = scmp.lt.s32.totalorder %s285, 1
      %s289 = scalar_select %p288, %s285, 1
      %s290 = smul.addr %s287, 2
      %s291 = sadd.s32 %s289, %s290
      %s292 = smul.addr %s291, 4
      %s293 = scalar_lea.vmem %s1, %s292
      %s294 = smul.u32 2, %s23
      %s295 = smul.u32 2, %s22
      %p296 = scmp.lt.s32.totalorder %s21, 1
      %s297 = scalar_select %p296, %s21, 1
      %p298 = scmp.lt.s32.totalorder %s295, 1
      %s299 = scalar_select %p298, %s295, 1
      %s300 = smul.addr %s297, 2
      %s301 = sadd.s32 %s299, %s300
      %s302 = smul.addr %s301, 8
      %s303 = scalar_lea.vmem %s3, %s302
      %s304 = smul.u32 2, %s22
      %s305 = smul.u32 2, %s22
      %p306 = scmp.lt.s32.totalorder %s21, 1
      %s307 = scalar_select %p306, %s21, 1
      %p308 = scmp.lt.s32.totalorder %s305, 1
      %s309 = scalar_select %p308, %s305, 1
      %s310 = smul.addr %s307, 2
      %s311 = sadd.s32 %s309, %s310
      %s312 = smul.addr %s311, 8
      %s313 = scalar_lea.vmem %s4, %s312
      %s314 = smul.u32 2, %s22
      %p316 = scmp.eq.s32.totalorder %s23, 0
      // Predicated region
      $region33: #{batched_graphsage.2} parent=31 // pred_check
        %p317 = pneg %p316
      $region34: #{batched_graphsage.2} parent=31 // pred_check_branch
        %319 = sbr.rel (%p317) target = $region36
      $region35: #{batched_graphsage.2} parent=31 // pred_region
        %320 = vst [vmem:[#allocation2] sm:$0xff] 0.0
        %321 = vst [vmem:[#allocation2 + $0x8] sm:$0xff] 0.0
      $region36: #{batched_graphsage.2} parent=31 // pred_fallthru
        _
      %v322 = vld [vmem:[%s283] sm:$0xf]
      %v323 = vld [vmem:[%s283 + $0x4] sm:$0xf]
      %v324 = vld [vmem:[#allocation2] sm:$0xff]
      %v325 = vld [vmem:[#allocation2 + $0x8] sm:$0xff]
      %v326 = vld [vmem:[%s293] sm:$0xf]
      %v327 = vld [vmem:[%s293 + $0x4] sm:$0xf]
      %v330 = vunpack.c.l.b16 %v322
      %v331 = vunpack.c.l.b16 %v323
      %v332 = vpack.c.b16 %v331, %v330
      %v335 = vunpack.c.l.b16 %v326
      %v336 = vunpack.c.l.b16 %v327
      %v337 = vpack.c.b16 %v336, %v335
      %vm339 = vcmask 130048
      %v341 = vsel %vm339, %v332, 0
      %343 = vmatprep.subr.bf16.mxu0 0
      %344 = vmatpush1.bf16.msra.mxu0 %v337
      %345 = vmatprep.subr.bf16.mxu0 0
      %346 = vmatpush1.bf16.msra.mxu0 0
      %347 = vmatprep.subr.bf16.mxu0 0
      %348 = vmatpush1.bf16.msra.mxu0 0
      %349 = vmatprep.subr.bf16.mxu0 0
      %350 = vmatpush1.bf16.msra.mxu0 0
      %351 = vmatprep.subr.bf16.mxu0 0
      %352 = vmatpush1.bf16.msra.mxu0 0
      %353 = vmatprep.subr.bf16.mxu0 0
      %354 = vmatpush1.bf16.msra.mxu0 0
      %355 = vmatprep.subr.bf16.mxu0 0
      %356 = vmatpush1.bf16.msra.mxu0 0
      %357 = vmatprep.subr.bf16.mxu0 0
      %358 = vmatpush1.bf16.msra.mxu0 0
      %359 = vmatprep.subr.bf16.mxu0 0
      %360 = vmatpush1.bf16.msra.mxu0 0
      %361 = vmatprep.subr.bf16.mxu0 0
      %362 = vmatpush1.bf16.msra.mxu0 0
      %363 = vmatprep.subr.bf16.mxu0 0
      %364 = vmatpush1.bf16.msra.mxu0 0
      %365 = vmatprep.subr.bf16.mxu0 0
      %366 = vmatpush1.bf16.msra.mxu0 0
      %367 = vmatprep.subr.bf16.mxu0 0
      %368 = vmatpush1.bf16.msra.mxu0 0
      %369 = vmatprep.subr.bf16.mxu0 0
      %370 = vmatpush1.bf16.msra.mxu0 0
      %371 = vmatprep.subr.bf16.mxu0 0
      %372 = vmatpush1.bf16.msra.mxu0 0
      %373 = vmatprep.subr.bf16.mxu0 0
      %374 = vmatpush1.bf16.msra.mxu0 0
      %375 = vmatprep.mubr.bf16.mxu0 0
      %376 = vmatmul.mubr.bf16.gmra.mrb[0].mxu0 %v341
      %v377 = vpop.f32.mrb[0].mxu0
      %v378 = vadd.f32 0.0, %v377
      %v379 = vpop.f32.mrb[0].mxu0
      %v380 = vpop.f32.mrb[0].mxu0
      %v381 = vadd.f32 0.0, %v380
      %v382 = vpop.f32.mrb[0].mxu0
      %383 = vdwg.mxu0
      %v384 = vadd.f32 %v324, %v378
      %v385 = vadd.f32 %v325, %v381
      %386 = vst [vmem:[#allocation2] sm:$0xff] %v384
      %387 = vst [vmem:[#allocation2 + $0x8] sm:$0xff] %v385
      // Predicated region
      $region37: #{batched_graphsage.2} parent=31 // pred_check
        %p388 = pneg %p316
      $region38: #{batched_graphsage.2} parent=31 // pred_check_branch
        %390 = sbr.rel (%p388) target = $region40
      $region39: #{batched_graphsage.2} parent=31 // pred_region
        %v391 = vld [vmem:[#allocation2] sm:$0xff]
        %v392 = vld [vmem:[#allocation2 + $0x8] sm:$0xff]
        %v393 = vld [vmem:[%s2] sm:$0x1]
        %v395 = vlaneseq
        %v396 = vshrl.u32 %v395, 7
        %v397 = vsub.s32 0, %v396
        %v398 = vrot.slane %v393, %v397
        %v400 = vadd.f32 %v391, %v398
        %v401 = vadd.f32 %v392, %v398
        %v402 = vmul.f32 %v400, %v400
        %v403 = vmul.f32 %v401, %v401
        %404 = vadd.xlane.f32.xlu0 %v402
        %v405 = vpop.xlane.xlu0 %404
        %406 = vadd.xlane.f32.xlu0 %v403
        %v407 = vpop.xlane.xlu0 %406
        %v408 = vmax.f32 %v405, 1e-24
        %v409 = vmax.f32 %v407, 1e-24
        %v410 = vrsqrt.pop %v408
        %v411 = vrsqrt.pop %v409
        %v412 = vmul.f32 %v400, %v410
        %v413 = vmul.f32 %v401, %v411
        %v414 = vmax.f32 %v412, 0.0
        %v415 = vmax.f32 %v413, 0.0
        %416 = vst [vmem:[%s303] sm:$0xff] %v414
        %417 = vst [vmem:[%s303 + $0x8] sm:$0xff] %v415
        %418 = vadd.xlane.f32.xlu0 %v414
        %v419 = vpop.xlane.xlu0 %418
        %420 = vadd.xlane.f32.xlu0 %v415
        %v421 = vpop.xlane.xlu0 %420
        %vm422 = vcmask 7168
        %423 = vst.msk [vmem:[%s313] sm:$0xff] %vm422, %v419
        %424 = vst.msk [vmem:[%s313 + $0x8] sm:$0xff] %vm422, %v421
        %v425 = vmul.f32 %v414, %v414
        %v426 = vmul.f32 %v415, %v415
        %427 = vadd.xlane.f32.xlu0 %v425
        %v428 = vpop.xlane.xlu0 %427
        %429 = vadd.xlane.f32.xlu0 %v426
        %v430 = vpop.xlane.xlu0 %429
        %vm431 = vcmask 15368
        %432 = vst.msk [vmem:[%s313] sm:$0xff] %vm431, %v428
        %433 = vst.msk [vmem:[%s313 + $0x8] sm:$0xff] %vm431, %v430
      $region40: #{batched_graphsage.2} parent=31 // pred_fallthru
        _
      %s434 = smul.u32 2, %s22
      %p435 = scmp.lt.s32.totalorder %s21, 1
      %s436 = scalar_select %p435, %s21, 1
      %p437 = scmp.lt.s32.totalorder %s434, 1
      %s438 = scalar_select %p437, %s434, 1
      %s439 = smul.addr %s436, 2
      %s440 = sadd.s32 %s438, %s439
      %s441 = smul.addr %s440, 8
      %s442 = scalar_lea.vmem %s3, %s441
      %s443 = smul.u32 2, %s22
      %p444 = scmp.lt.s32.totalorder %s21, 1
      %s445 = scalar_select %p444, %s21, 1
      %p446 = scmp.lt.s32.totalorder %s443, 1
      %s447 = scalar_select %p446, %s443, 1
      %s448 = smul.addr %s445, 2
      %s449 = sadd.s32 %s447, %s448
      %s450 = smul.addr %s449, 8
      %s451 = scalar_lea.vmem %s4, %s450
      // Predicated region
      $region41: #{batched_graphsage.2} parent=31 // pred_check
        %p452 = pneg %p134
      $region42: #{batched_graphsage.2} parent=31 // pred_check_branch
        %454 = sbr.rel (%p452) target = $region44
      $region43: #{batched_graphsage.2} parent=31 // pred_region
        %s455 = smul.u32 2, %s22
      $region44: #{batched_graphsage.2} parent=31 // pred_fallthru
        _
      // Predicated region
      $region45: #{batched_graphsage.2} parent=31 // pred_check
        %p456 = pneg %p162
      $region46: #{batched_graphsage.2} parent=31 // pred_check_branch
        %458 = sbr.rel (%p456) target = $region48
      $region47: #{batched_graphsage.2} parent=31 // pred_region
        %s459 = smul.u32 2, %s22
      $region48: #{batched_graphsage.2} parent=31 // pred_fallthru
        _
    $region32: #{batched_graphsage.2} parent=5 // pred_fallthru
      _
    %p460 = scmp.le.s32.totalorder 2, %s11
    // Predicated region
    $region49: #{batched_graphsage.2} parent=5 // pred_check
      %p461 = pneg %p460
    $region50: #{batched_graphsage.2} parent=5 // pred_check_branch
      %463 = sbr.rel (%p461) target = $region52
    $region51: #{batched_graphsage.2} parent=5 // pred_region
      %s464 = ssub.s32 %s11, 2
      // Predicated region
      $region53: #{batched_graphsage.2} parent=51 // pred_check
        %p465 = pneg %p140
      $region54: #{batched_graphsage.2} parent=51 // pred_check_branch
        %467 = sbr.rel (%p465) target = $region56
      $region55: #{batched_graphsage.2} parent=51 // pred_region
        %s468 = smul.u32 2, %s25
        %p469 = scmp.lt.s32.totalorder %s24, 1
        %s470 = scalar_select %p469, %s24, 1
        %p471 = scmp.lt.s32.totalorder %s468, 1
        %s472 = scalar_select %p471, %s468, 1
        %s473 = smul.addr %s470, 2
        %s474 = sadd.s32 %s472, %s473
        %s475 = smul.addr %s474, 8
        %s476 = scalar_lea.vmem %s3, %s475
      $region56: #{batched_graphsage.2} parent=51 // pred_fallthru
        _
      // Predicated region
      $region57: #{batched_graphsage.2} parent=51 // pred_check
        %p477 = pneg %p168
      $region58: #{batched_graphsage.2} parent=51 // pred_check_branch
        %479 = sbr.rel (%p477) target = $region60
      $region59: #{batched_graphsage.2} parent=51 // pred_region
        %s480 = smul.u32 2, %s25
        %p481 = scmp.lt.s32.totalorder %s24, 1
        %s482 = scalar_select %p481, %s24, 1
        %p483 = scmp.lt.s32.totalorder %s480, 1
        %s484 = scalar_select %p483, %s480, 1
        %s485 = smul.addr %s482, 2
        %s486 = sadd.s32 %s484, %s485
        %s487 = smul.addr %s486, 8
        %s488 = scalar_lea.vmem %s4, %s487
      $region60: #{batched_graphsage.2} parent=51 // pred_fallthru
        _
    $region52: #{batched_graphsage.2} parent=5 // pred_fallthru
      _
  $region6: #{batched_graphsage.2} parent=0 // loop_footer
    %s15 = sadd.s32 1, %s11
  $region7: #{batched_graphsage.2} parent=0 // loop_footer_branch
    %10 = sbr.rel target = $region3
  $region8: #{batched_graphsage.2} parent=0 // loop_exit
    _

</llo_original>
